<compile_context>
chip_gen: v7x
topology: tpu7x:2x2x1
jax: 0.10.0
libtpu: 0.0.40
codegen_flags: <defaults>
</compile_context>

<pallas_src>
import jax
import jax.numpy as jnp
from jax.experimental import pallas as pl
from jax.experimental.pallas import tpu as pltpu


def _round_up(x, m):
    return (x + m - 1) // m * m


# ---------------------------------------------------------------------------
# Pallas kernels
# ---------------------------------------------------------------------------
def _conv_matmul_bn_silu_kernel(x_ref, w_ref, shift_ref, o_ref):
    # (TM, K) @ (K, TN) on the MXU: bf16 operands, f32 accumulation.
    y = jnp.dot(x_ref[...], w_ref[...], preferred_element_type=jnp.float32)
    # Folded-BN: scale already in the weights, only the shift remains (f32).
    y = y + shift_ref[...]
    # SiLU: y * sigmoid(y).  exp and approx-reciprocal both run on the EUP slot,
    # keeping the VALU path free; math stays in f32.
    sig = pl.reciprocal(1.0 + jnp.exp(-y), approx=True)
    o_ref[...] = (y * sig).astype(o_ref.dtype)


def _linear_kernel(x_ref, w_ref, b_ref, o_ref):
    y = jnp.dot(x_ref[...], w_ref[...], preferred_element_type=jnp.float32)
    o_ref[...] = y + b_ref[...]


# ---------------------------------------------------------------------------
# Wrappers (im2col / parameter plumbing is plain-JAX glue)
# ---------------------------------------------------------------------------
def conv_bn_silu(x_nhwc, w_folded_oihw, shift, *, stride, pad, tm_max=256):
    """Conv2d(bias=False) + BatchNorm(scale folded into weights, shift here) + SiLU."""
    cout, cin, kh, kw = w_folded_oihw.shape
    b, h, w_, c = x_nhwc.shape
    assert c == cin

    x_nhwc = x_nhwc.astype(jnp.bfloat16)
    xp = jnp.pad(x_nhwc, ((0, 0), (pad, pad), (pad, pad), (0, 0)))
    ho = (h + 2 * pad - kh) // stride + 1
    wo = (w_ + 2 * pad - kw) // stride + 1

    # im2col: patch ordering is (ki, kj, cin) to match the reshaped weight below.
    # TODO(synk): im2col is still materialized in HBM (kh*kw expansion); an
    # Element/ds-based gather inside the kernel would avoid that for large inputs.
    patches = []
    for i in range(kh):
        for j in range(kw):
            patches.append(
                xp[:, i:i + stride * ho:stride, j:j + stride * wo:stride, :]
            )
    patches = jnp.concatenate(patches, axis=-1)  # (B, Ho, Wo, kh*kw*Cin), bf16
    m = b * ho * wo
    k = kh * kw * cin
    lhs = patches.reshape(m, k)

    rhs = jnp.transpose(w_folded_oihw, (2, 3, 1, 0)).reshape(k, cout)
    rhs = rhs.astype(jnp.bfloat16)

    n = cout
    tn = n if n <= 128 else 128  # channel counts are <=128 or multiples of 128
    assert n % tn == 0

    # M tiling: TM multiple of 8, bounded; pad M up to a multiple of TM.
    tm = min(tm_max, _round_up(m, 8))
    m_pad = _round_up(m, tm)
    if m_pad != m:
        lhs = jnp.pad(lhs, ((0, m_pad - m), (0, 0)))

    grid = (m_pad // tm, n // tn)
    cost = pl.CostEstimate(
        flops=2 * m_pad * k * n,
        transcendentals=m_pad * n,
        bytes_accessed=2 * (m_pad * k + k * n + m_pad * n) + 4 * n,
    )

    out = pl.pallas_call(
        _conv_matmul_bn_silu_kernel,
        out_shape=jax.ShapeDtypeStruct((m_pad, n), jnp.bfloat16),
        grid=grid,
        in_specs=[
            pl.BlockSpec((tm, k), lambda i, j: (i, 0)),
            pl.BlockSpec((k, tn), lambda i, j: (0, j)),
            pl.BlockSpec((1, tn), lambda i, j: (0, j)),
        ],
        out_specs=pl.BlockSpec((tm, tn), lambda i, j: (i, j)),
        compiler_params=pltpu.CompilerParams(
            dimension_semantics=("parallel", "parallel"),
            vmem_limit_bytes=32 * 1024 * 1024,
        ),
        cost_estimate=cost,
    )(lhs, rhs, shift.reshape(1, n).astype(jnp.float32))

    out = out[:m]
    return out.reshape(b, ho, wo, cout)


def linear(x, w, b_vec):
    """Lane-dense Linear head: pad N up to 128 (and M up to 8), slice outside."""
    m, k = x.shape
    k2, n = w.shape
    assert k == k2

    m_pad = _round_up(m, 8)
    n_pad = _round_up(n, 128)

    x_p = jnp.pad(x.astype(jnp.bfloat16), ((0, m_pad - m), (0, 0)))
    w_p = jnp.pad(w.astype(jnp.bfloat16), ((0, 0), (0, n_pad - n)))
    b_p = jnp.pad(b_vec.astype(jnp.float32), (0, n_pad - n)).reshape(1, n_pad)

    cost = pl.CostEstimate(
        flops=2 * m_pad * k * n_pad,
        transcendentals=0,
        bytes_accessed=2 * (m_pad * k + k * n_pad) + 4 * (m_pad * n_pad + n_pad),
    )

    out = pl.pallas_call(
        _linear_kernel,
        out_shape=jax.ShapeDtypeStruct((m_pad, n_pad), jnp.float32),
        grid=(1,),
        in_specs=[
            pl.BlockSpec((m_pad, k), lambda i: (0, 0)),
            pl.BlockSpec((k, n_pad), lambda i: (0, 0)),
            pl.BlockSpec((1, n_pad), lambda i: (0, 0)),
        ],
        out_specs=pl.BlockSpec((m_pad, n_pad), lambda i: (0, 0)),
        compiler_params=pltpu.CompilerParams(
            dimension_semantics=("arbitrary",),
            vmem_limit_bytes=32 * 1024 * 1024,
        ),
        cost_estimate=cost,
    )(x_p, w_p, b_p)

    return out[:m, :n]


# ---------------------------------------------------------------------------
# Deterministic parameter init (shapes implied by the module; synthetic weights)
# ---------------------------------------------------------------------------
def init_params(key):
    # simplified backbone: (cin, cout, kernel, stride, pad); last layer -> 1792 ch
    cfg = [
        (3, 32, 3, 2, 1),
        (32, 64, 3, 2, 1),
        (64, 128, 3, 2, 1),
        (128, 256, 3, 2, 1),
        (256, 1792, 1, 1, 0),
    ]
    eps = 1e-5
    layers = []
    for (cin, cout, ksz, s, p) in cfg:
        key, k1, k2, k3, k4, k5 = jax.random.split(key, 6)
        w = jax.random.normal(k1, (cout, cin, ksz, ksz), jnp.float32) * 0.05
        gamma = 1.0 + 0.1 * jax.random.normal(k2, (cout,), jnp.float32)
        beta = 0.1 * jax.random.normal(k3, (cout,), jnp.float32)
        mean = 0.1 * jax.random.normal(k4, (cout,), jnp.float32)
        var = jnp.abs(jax.random.normal(k5, (cout,), jnp.float32)) + 0.5
        scale = gamma / jnp.sqrt(var + eps)
        shift = beta - mean * scale
        # Fold the BN scale into the conv weights once, on the host.
        w_folded = w * scale[:, None, None, None]
        layers.append(dict(w=w_folded, shift=shift, stride=s, pad=p))

    key, k1, k2 = jax.random.split(key, 3)
    out_w = jax.random.normal(k1, (1792, 1), jnp.float32) * 0.02  # nn.Linear(1792, 1)
    out_b = jax.random.normal(k2, (1,), jnp.float32) * 0.02
    return dict(backbone=layers, out_w=out_w, out_b=out_b)


# ---------------------------------------------------------------------------
# Forward pass (mirrors EfficientNet_model.forward)
# ---------------------------------------------------------------------------
def efficientnet_model_forward(params, x_nchw):
    # x = self.backbone(input)
    x = jnp.transpose(x_nchw, (0, 2, 3, 1)).astype(jnp.bfloat16)  # NCHW -> NHWC, bf16
    for layer in params["backbone"]:
        x = conv_bn_silu(
            x, layer["w"], layer["shift"],
            stride=layer["stride"], pad=layer["pad"],
        )
    # x = torch.flatten(x, 1): NCHW flatten == NHWC flatten only because spatial is 1x1.
    assert x.shape[1] == 1 and x.shape[2] == 1, (
        "backbone must reduce spatial dims to 1x1 for flatten ordering to match torch"
    )
    b = x.shape[0]
    x = x.reshape(b, -1)  # (B, 1792)
    # x = self.drop(x)
    # TODO(synk): Dropout(0.5) is identity in eval/predict mode; train-mode dropout not emitted.
    # output = self.out(x)
    return linear(x, params["out_w"], params["out_b"])


if __name__ == "__main__":
    key = jax.random.PRNGKey(0)
    pkey, xkey = jax.random.split(key)
    params = init_params(pkey)
    x = jax.random.normal(xkey, (2, 3, 16, 16), jnp.float32)  # small NCHW input

    out = efficientnet_model_forward(params, x)
    out = jax.block_until_ready(out)
    assert out.shape == (2, 1), out.shape
    assert out.dtype == jnp.float32
    print("KERNEL_OK")
</pallas_src>

<mosaic_0001>
module attributes {stable_mosaic.version = 11 : i64} {
  func.func @_conv_matmul_bn_silu_kernel(%arg0: i32, %arg1: i32, %arg2: memref<128x27xbf16, #tpu.memory_space<vmem>>, %arg3: memref<27x32xbf16, #tpu.memory_space<vmem>>, %arg4: memref<1x32xf32, #tpu.memory_space<vmem>>, %arg5: memref<128x32xbf16, #tpu.memory_space<vmem>>) attributes {dimension_semantics = [#tpu.dimension_semantics<parallel>, #tpu.dimension_semantics<parallel>], iteration_bounds = array<i64: 1, 1>, scalar_prefetch = 0 : i64, scratch_operands = 0 : i64, tpu.core_type = #tpu.core_type<tc>, window_params = [{transform_indices = @transform_0, window_bounds = array<i64: 128, 27>}, {transform_indices = @transform_1, window_bounds = array<i64: 27, 32>}, {transform_indices = @transform_2, window_bounds = array<i64: 1, 32>}, {transform_indices = @transform_3, window_bounds = array<i64: 128, 32>}]} {
    %c0 = arith.constant 0 : index
    %c0_0 = arith.constant 0 : index
    %0 = vector.load %arg2[%c0, %c0_0] : memref<128x27xbf16, #tpu.memory_space<vmem>>, vector<128x27xbf16>
    %c0_1 = arith.constant 0 : index
    %c0_2 = arith.constant 0 : index
    %1 = vector.load %arg3[%c0_1, %c0_2] : memref<27x32xbf16, #tpu.memory_space<vmem>>, vector<27x32xbf16>
    %cst = arith.constant dense<0.000000e+00> : vector<128x32xf32>
    %2 = tpu.matmul %0, %1, %cst {dimension_numbers = #tpu.dot_dimension_numbers<[1], [0], [0], [1], [0, 0, 1, 1], [], []>} : vector<128x27xbf16>, vector<27x32xbf16>, vector<128x32xf32> -> vector<128x32xf32>
    %c0_3 = arith.constant 0 : index
    %c0_4 = arith.constant 0 : index
    %3 = vector.load %arg4[%c0_3, %c0_4] : memref<1x32xf32, #tpu.memory_space<vmem>>, vector<1x32xf32>
    %4 = vector.broadcast %3 : vector<1x32xf32> to vector<128x32xf32>
    %5 = arith.addf %2, %4 : vector<128x32xf32>
    %cst_5 = arith.constant 0.000000e+00 : f32
    %6 = vector.broadcast %cst_5 : f32 to vector<128x32xf32>
    %7 = arith.subf %6, %5 : vector<128x32xf32>
    %8 = math.exp %7 : vector<128x32xf32>
    %cst_6 = arith.constant 1.000000e+00 : f32
    %9 = vector.broadcast %cst_6 : f32 to vector<128x32xf32>
    %10 = arith.addf %9, %8 : vector<128x32xf32>
    %11 = tpu.reciprocal %10 {approx = true} : vector<128x32xf32> -> vector<128x32xf32>
    %12 = arith.mulf %5, %11 : vector<128x32xf32>
    %13 = arith.truncf %12 : vector<128x32xf32> to vector<128x32xbf16>
    %c0_7 = arith.constant 0 : index
    %c0_8 = arith.constant 0 : index
    %14 = vector.load %arg5[%c0_7, %c0_8] : memref<128x32xbf16, #tpu.memory_space<vmem>>, vector<128x32xbf16>
    tpu.vector_store %arg5[%c0_7, %c0_8], %13 {strides = array<i32>} : memref<128x32xbf16, #tpu.memory_space<vmem>>, vector<128x32xbf16>,
    return
  }
  func.func @transform_0(%arg0: i32, %arg1: i32) -> (i32, i32) {
    %c0_i32 = arith.constant 0 : i32
    %c0_i32_0 = arith.constant 0 : i32
    return %arg0, %c0_i32 : i32, i32
  }
  func.func @transform_1(%arg0: i32, %arg1: i32) -> (i32, i32) {
    %c0_i32 = arith.constant 0 : i32
    %c0_i32_0 = arith.constant 0 : i32
    return %c0_i32, %arg1 : i32, i32
  }
  func.func @transform_2(%arg0: i32, %arg1: i32) -> (i32, i32) {
    %c0_i32 = arith.constant 0 : i32
    %c0_i32_0 = arith.constant 0 : i32
    return %c0_i32, %arg1 : i32, i32
  }
  func.func @transform_3(%arg0: i32, %arg1: i32) -> (i32, i32) {
    %c0_i32 = arith.constant 0 : i32
    return %arg0, %arg1 : i32, i32
  }
}

</mosaic_0001>

<llo_original>
// kernel: tpu_custom_call.1
$region0: #{tpu_custom_call.1}
  #allocation0 [shape = 'u32[]', space=smem, size = 0x4, offset = 0x4, fixed_abs, tag = 'smem constant byte address 0x4 - core index']
  #allocation1 [shape = 'u32[144,128]{1,0:T(1,128)}', space=vmem, size = 0x12000, scoped, tag = 'internal scratch']
  %s0 = inlined_call_operand.vmem [shape: bf16[128,27], index: 0, kind: input, shape index: {}]
  %s1 = inlined_call_operand.vmem [shape: bf16[27,32], index: 1, kind: input, shape index: {}]
  %s2 = inlined_call_operand.vmem [shape: f32[1,32], index: 2, kind: input, shape index: {}]
  %s3 = inlined_call_operand.vmem [shape: bf16[128,32], index: 3, kind: output, shape index: {}]
  %s4 = sld [smem:[#allocation0]]
  $region22: #{tpu_custom_call.1} parent=0
    _
  %s6 = ssub.s32 1, %s4
  %s7 = scalar_select 0, %s6, %s4
  // Predicated region
  $region2: #{tpu_custom_call.1} parent=0 // pred_check
    _
  $region3: #{tpu_custom_call.1} parent=0 // pred_check_branch
    %9 = sbr.rel (0) target = $region5
  $region4: #{tpu_custom_call.1} parent=0 // pred_region
    _
  $region5: #{tpu_custom_call.1} parent=0 // pred_fallthru
    _
  // Predicated region
  $region6: #{tpu_custom_call.1} parent=0 // pred_check
    _
  $region7: #{tpu_custom_call.1} parent=0 // pred_check_branch
    %11 = sbr.rel (0) target = $region9
  $region8: #{tpu_custom_call.1} parent=0 // pred_region
    _
  $region9: #{tpu_custom_call.1} parent=0 // pred_fallthru
    _
  // Predicated region
  $region10: #{tpu_custom_call.1} parent=0 // pred_check
    _
  $region11: #{tpu_custom_call.1} parent=0 // pred_check_branch
    %13 = sbr.rel (0) target = $region13
  $region12: #{tpu_custom_call.1} parent=0 // pred_region
    _
  $region13: #{tpu_custom_call.1} parent=0 // pred_fallthru
    _
  %v15 = vld [vmem:[%s0] sm:$0xf]
  %v16 = vld [vmem:[%s0 + $0x4] sm:$0xf]
  %v17 = vld [vmem:[%s0 + $0x8] sm:$0xf]
  %v18 = vld [vmem:[%s0 + $0xc] sm:$0xf]
  %v19 = vld [vmem:[%s0 + $0x10] sm:$0xf]
  %v20 = vld [vmem:[%s0 + $0x14] sm:$0xf]
  %v21 = vld [vmem:[%s0 + $0x18] sm:$0xf]
  %v22 = vld [vmem:[%s0 + $0x1c] sm:$0xf]
  %v23 = vld [vmem:[%s0 + $0x20] sm:$0xf]
  %v24 = vld [vmem:[%s0 + $0x24] sm:$0xf]
  %v25 = vld [vmem:[%s0 + $0x28] sm:$0xf]
  %v26 = vld [vmem:[%s0 + $0x2c] sm:$0xf]
  %v27 = vld [vmem:[%s0 + $0x30] sm:$0xf]
  %v28 = vld [vmem:[%s0 + $0x34] sm:$0xf]
  %v29 = vld [vmem:[%s0 + $0x38] sm:$0xf]
  %v30 = vld [vmem:[%s0 + $0x3c] sm:$0xf]
  %v31 = vld [vmem:[%s1] sm:$0xf]
  %v32 = vld [vmem:[%s1 + $0x4] sm:$0xf]
  %v33 = vld [vmem:[%s1 + $0x8] sm:$0xf]
  %v34 = vld [vmem:[%s1 + $0xc] sm:$0x3]
  %v35 = vld [vmem:[%s2] sm:$0x1]
  %v37 = vlaneseq
  %v38 = vshrl.u32 %v37, 7
  %v39 = vsub.s32 0, %v38
  %v40 = vrot.slane %v35, %v39
  %v58 = vunpack.c.l.b16 %v15
  %v59 = vunpack.c.l.b16 %v16
  %v60 = vunpack.c.l.b16 %v17
  %v61 = vunpack.c.l.b16 %v18
  %v62 = vunpack.c.l.b16 %v19
  %v63 = vunpack.c.l.b16 %v20
  %v64 = vunpack.c.l.b16 %v21
  %v65 = vunpack.c.l.b16 %v22
  %v66 = vunpack.c.l.b16 %v23
  %v67 = vunpack.c.l.b16 %v24
  %v68 = vunpack.c.l.b16 %v25
  %v69 = vunpack.c.l.b16 %v26
  %v70 = vunpack.c.l.b16 %v27
  %v71 = vunpack.c.l.b16 %v28
  %v72 = vunpack.c.l.b16 %v29
  %v73 = vunpack.c.l.b16 %v30
  %v74 = vpack.c.b16 %v59, %v58
  %v75 = vpack.c.b16 %v61, %v60
  %v76 = vpack.c.b16 %v63, %v62
  %v77 = vpack.c.b16 %v65, %v64
  %v78 = vpack.c.b16 %v67, %v66
  %v79 = vpack.c.b16 %v69, %v68
  %v80 = vpack.c.b16 %v71, %v70
  %v81 = vpack.c.b16 %v73, %v72
  %v86 = vunpack.c.l.b16 %v31
  %v87 = vunpack.c.l.b16 %v32
  %v88 = vunpack.c.l.b16 %v33
  %v89 = vunpack.c.l.b16 %v34
  %v90 = vpack.c.b16 %v87, %v86
  %v91 = vpack.c.b16 %v89, %v88
  %vm93 = vcmask 220160
  %v95 = vsel %vm93, %v74, 0
  %v98 = vsel %vm93, %v75, 0
  %v101 = vsel %vm93, %v76, 0
  %v104 = vsel %vm93, %v77, 0
  %v107 = vsel %vm93, %v78, 0
  %v110 = vsel %vm93, %v79, 0
  %v113 = vsel %vm93, %v80, 0
  %v116 = vsel %vm93, %v81, 0
  %vm118 = vcmask 1044480
  %vm119 = vcmask 1045504
  %v120 = vsel %vm118, 4294967295, 65535
  %v121 = vsel %vm119, %v120, 0
  %v123 = vand.u32 %v91, %v121
  %125 = vmatprep.subr.bf16.mxu0 0
  %126 = vmatpush1.bf16.msra.mxu0 %v90
  %127 = vmatprep.subr.bf16.mxu0 0
  %128 = vmatpush1.bf16.msra.mxu0 %v123
  %129 = vmatprep.subr.bf16.mxu0 0
  %130 = vmatpush1.bf16.msra.mxu0 0
  %131 = vmatprep.subr.bf16.mxu0 0
  %132 = vmatpush1.bf16.msra.mxu0 0
  %133 = vmatprep.subr.bf16.mxu0 0
  %134 = vmatpush1.bf16.msra.mxu0 0
  %135 = vmatprep.subr.bf16.mxu0 0
  %136 = vmatpush1.bf16.msra.mxu0 0
  %137 = vmatprep.subr.bf16.mxu0 0
  %138 = vmatpush1.bf16.msra.mxu0 0
  %139 = vmatprep.subr.bf16.mxu0 0
  %140 = vmatpush1.bf16.msra.mxu0 0
  %141 = vmatprep.subr.bf16.mxu0 0
  %142 = vmatpush1.bf16.msra.mxu0 0
  %143 = vmatprep.subr.bf16.mxu0 0
  %144 = vmatpush1.bf16.msra.mxu0 0
  %145 = vmatprep.subr.bf16.mxu0 0
  %146 = vmatpush1.bf16.msra.mxu0 0
  %147 = vmatprep.subr.bf16.mxu0 0
  %148 = vmatpush1.bf16.msra.mxu0 0
  %149 = vmatprep.subr.bf16.mxu0 0
  %150 = vmatpush1.bf16.msra.mxu0 0
  %151 = vmatprep.subr.bf16.mxu0 0
  %152 = vmatpush1.bf16.msra.mxu0 0
  %153 = vmatprep.subr.bf16.mxu0 0
  %154 = vmatpush1.bf16.msra.mxu0 0
  %155 = vmatprep.subr.bf16.mxu0 0
  %156 = vmatpush1.bf16.msra.mxu0 0
  %157 = vmatprep.mubr.bf16.mxu0 0
  %158 = vmatmul.mubr.bf16.gmra.mrb[0].mxu0 %v95
  %v159 = vpop.f32.mrb[0].mxu0
  %v160 = vadd.f32 %v40, %v159
  %v161 = vpop.f32.mrb[0].mxu0
  %v162 = vpop.f32.mrb[0].mxu0
  %v163 = vadd.f32 %v40, %v162
  %v164 = vpop.f32.mrb[0].mxu0
  %165 = vmatprep.mubr.bf16.mxu0 0
  %166 = vmatmul.mubr.bf16.gmra.mrb[0].mxu0 %v98
  %v167 = vpop.f32.mrb[0].mxu0
  %v168 = vadd.f32 %v40, %v167
  %v169 = vpop.f32.mrb[0].mxu0
  %v170 = vpop.f32.mrb[0].mxu0
  %v171 = vadd.f32 %v40, %v170
  %v172 = vpop.f32.mrb[0].mxu0
  %173 = vmatprep.mubr.bf16.mxu0 0
  %174 = vmatmul.mubr.bf16.gmra.mrb[0].mxu0 %v101
  %v175 = vpop.f32.mrb[0].mxu0
  %v176 = vadd.f32 %v40, %v175
  %v177 = vpop.f32.mrb[0].mxu0
  %v178 = vpop.f32.mrb[0].mxu0
  %v179 = vadd.f32 %v40, %v178
  %v180 = vpop.f32.mrb[0].mxu0
  %181 = vmatprep.mubr.bf16.mxu0 0
  %182 = vmatmul.mubr.bf16.gmra.mrb[0].mxu0 %v104
  %v183 = vpop.f32.mrb[0].mxu0
  %v184 = vadd.f32 %v40, %v183
  %v185 = vpop.f32.mrb[0].mxu0
  %v186 = vpop.f32.mrb[0].mxu0
  %v187 = vadd.f32 %v40, %v186
  %v188 = vpop.f32.mrb[0].mxu0
  %189 = vmatprep.mubr.bf16.mxu0 0
  %190 = vmatmul.mubr.bf16.gmra.mrb[0].mxu0 %v107
  %v191 = vpop.f32.mrb[0].mxu0
  %v192 = vadd.f32 %v40, %v191
  %v193 = vpop.f32.mrb[0].mxu0
  %v194 = vpop.f32.mrb[0].mxu0
  %v195 = vadd.f32 %v40, %v194
  %v196 = vpop.f32.mrb[0].mxu0
  %197 = vmatprep.mubr.bf16.mxu0 0
  %198 = vmatmul.mubr.bf16.gmra.mrb[0].mxu0 %v110
  %v199 = vpop.f32.mrb[0].mxu0
  %v200 = vadd.f32 %v40, %v199
  %v201 = vpop.f32.mrb[0].mxu0
  %v202 = vpop.f32.mrb[0].mxu0
  %v203 = vadd.f32 %v40, %v202
  %v204 = vpop.f32.mrb[0].mxu0
  %205 = vmatprep.mubr.bf16.mxu0 0
  %206 = vmatmul.mubr.bf16.gmra.mrb[0].mxu0 %v113
  %v207 = vpop.f32.mrb[0].mxu0
  %v208 = vadd.f32 %v40, %v207
  %v209 = vpop.f32.mrb[0].mxu0
  %v210 = vpop.f32.mrb[0].mxu0
  %v211 = vadd.f32 %v40, %v210
  %v212 = vpop.f32.mrb[0].mxu0
  %213 = vmatprep.mubr.bf16.mxu0 0
  %214 = vmatmul.mubr.bf16.gmra.mrb[0].mxu0 %v116
  %v215 = vpop.f32.mrb[0].mxu0
  %v216 = vadd.f32 %v40, %v215
  %v217 = vpop.f32.mrb[0].mxu0
  %v218 = vpop.f32.mrb[0].mxu0
  %v219 = vadd.f32 %v40, %v218
  %v220 = vpop.f32.mrb[0].mxu0
  %221 = vdwg.mxu0
  %v222 = vsub.f32 0.0, %v160
  %v223 = vsub.f32 0.0, %v163
  %v224 = vsub.f32 0.0, %v168
  %v225 = vsub.f32 0.0, %v171
  %v226 = vsub.f32 0.0, %v176
  %v227 = vsub.f32 0.0, %v179
  %v228 = vsub.f32 0.0, %v184
  %v229 = vsub.f32 0.0, %v187
  %v230 = vsub.f32 0.0, %v192
  %v231 = vsub.f32 0.0, %v195
  %v232 = vsub.f32 0.0, %v200
  %v233 = vsub.f32 0.0, %v203
  %v234 = vsub.f32 0.0, %v208
  %v235 = vsub.f32 0.0, %v211
  %v236 = vsub.f32 0.0, %v216
  %v237 = vsub.f32 0.0, %v219
  %v238 = vmul.f32 %v222, 1.442695
  %v239 = vpow.pop %v238
  %v240 = vmul.f32 %v223, 1.442695
  %v241 = vpow.pop %v240
  %v242 = vmul.f32 %v224, 1.442695
  %v243 = vpow.pop %v242
  %v244 = vmul.f32 %v225, 1.442695
  %v245 = vpow.pop %v244
  %v246 = vmul.f32 %v226, 1.442695
  %v247 = vpow.pop %v246
  %v248 = vmul.f32 %v227, 1.442695
  %v249 = vpow.pop %v248
  %v250 = vmul.f32 %v228, 1.442695
  %v251 = vpow.pop %v250
  %v252 = vmul.f32 %v229, 1.442695
  %v253 = vpow.pop %v252
  %v254 = vmul.f32 %v230, 1.442695
  %v255 = vpow.pop %v254
  %v256 = vmul.f32 %v231, 1.442695
  %v257 = vpow.pop %v256
  %v258 = vmul.f32 %v232, 1.442695
  %v259 = vpow.pop %v258
  %v260 = vmul.f32 %v233, 1.442695
  %v261 = vpow.pop %v260
  %v262 = vmul.f32 %v234, 1.442695
  %v263 = vpow.pop %v262
  %v264 = vmul.f32 %v235, 1.442695
  %v265 = vpow.pop %v264
  %v266 = vmul.f32 %v236, 1.442695
  %v267 = vpow.pop %v266
  %v268 = vmul.f32 %v237, 1.442695
  %v269 = vpow.pop %v268
  %v270 = vadd.f32 %v239, 1.0
  %v271 = vadd.f32 %v241, 1.0
  %v272 = vadd.f32 %v243, 1.0
  %v273 = vadd.f32 %v245, 1.0
  %v274 = vadd.f32 %v247, 1.0
  %v275 = vadd.f32 %v249, 1.0
  %v276 = vadd.f32 %v251, 1.0
  %v277 = vadd.f32 %v253, 1.0
  %v278 = vadd.f32 %v255, 1.0
  %v279 = vadd.f32 %v257, 1.0
  %v280 = vadd.f32 %v259, 1.0
  %v281 = vadd.f32 %v261, 1.0
  %v282 = vadd.f32 %v263, 1.0
  %v283 = vadd.f32 %v265, 1.0
  %v284 = vadd.f32 %v267, 1.0
  %v285 = vadd.f32 %v269, 1.0
  %v286 = vrcp.pop %v270
  %v287 = vrcp.pop %v271
  %v288 = vrcp.pop %v272
  %v289 = vrcp.pop %v273
  %v290 = vrcp.pop %v274
  %v291 = vrcp.pop %v275
  %v292 = vrcp.pop %v276
  %v293 = vrcp.pop %v277
  %v294 = vrcp.pop %v278
  %v295 = vrcp.pop %v279
  %v296 = vrcp.pop %v280
  %v297 = vrcp.pop %v281
  %v298 = vrcp.pop %v282
  %v299 = vrcp.pop %v283
  %v300 = vrcp.pop %v284
  %v301 = vrcp.pop %v285
  %v302 = vmul.f32 %v160, %v286
  %v303 = vmul.f32 %v163, %v287
  %v304 = vmul.f32 %v168, %v288
  %v305 = vmul.f32 %v171, %v289
  %v306 = vmul.f32 %v176, %v290
  %v307 = vmul.f32 %v179, %v291
  %v308 = vmul.f32 %v184, %v292
  %v309 = vmul.f32 %v187, %v293
  %v310 = vmul.f32 %v192, %v294
  %v311 = vmul.f32 %v195, %v295
  %v312 = vmul.f32 %v200, %v296
  %v313 = vmul.f32 %v203, %v297
  %v314 = vmul.f32 %v208, %v298
  %v315 = vmul.f32 %v211, %v299
  %v316 = vmul.f32 %v216, %v300
  %v317 = vmul.f32 %v219, %v301
  %v318 = vpack.c.bf16 %v303, %v302
  %v319 = vpack.c.bf16 %v305, %v304
  %v320 = vpack.c.bf16 %v307, %v306
  %v321 = vpack.c.bf16 %v309, %v308
  %v322 = vpack.c.bf16 %v311, %v310
  %v323 = vpack.c.bf16 %v313, %v312
  %v324 = vpack.c.bf16 %v315, %v314
  %v325 = vpack.c.bf16 %v317, %v316
  %v334 = vunpack.c.l.b16 %v318
  %v335 = vunpack.c.h.b16 %v318
  %v336 = vunpack.c.l.b16 %v319
  %v337 = vunpack.c.h.b16 %v319
  %v338 = vunpack.c.l.b16 %v320
  %v339 = vunpack.c.h.b16 %v320
  %v340 = vunpack.c.l.b16 %v321
  %v341 = vunpack.c.h.b16 %v321
  %v342 = vunpack.c.l.b16 %v322
  %v343 = vunpack.c.h.b16 %v322
  %v344 = vunpack.c.l.b16 %v323
  %v345 = vunpack.c.h.b16 %v323
  %v346 = vunpack.c.l.b16 %v324
  %v347 = vunpack.c.h.b16 %v324
  %v348 = vunpack.c.l.b16 %v325
  %v349 = vunpack.c.h.b16 %v325
  %v350 = vpack.c.b16 %v334, %v334
  %v351 = vpack.c.b16 %v335, %v335
  %v352 = vpack.c.b16 %v336, %v336
  %v353 = vpack.c.b16 %v337, %v337
  %v354 = vpack.c.b16 %v338, %v338
  %v355 = vpack.c.b16 %v339, %v339
  %v356 = vpack.c.b16 %v340, %v340
  %v357 = vpack.c.b16 %v341, %v341
  %v358 = vpack.c.b16 %v342, %v342
  %v359 = vpack.c.b16 %v343, %v343
  %v360 = vpack.c.b16 %v344, %v344
  %v361 = vpack.c.b16 %v345, %v345
  %v362 = vpack.c.b16 %v346, %v346
  %v363 = vpack.c.b16 %v347, %v347
  %v364 = vpack.c.b16 %v348, %v348
  %v365 = vpack.c.b16 %v349, %v349
  %vm382 = vcmask 257024
  %383 = vst.msk [vmem:[%s3] sm:$0xf] %vm382, %v350
  %384 = vst.msk [vmem:[%s3 + $0x4] sm:$0xf] %vm382, %v351
  %385 = vst.msk [vmem:[%s3 + $0x8] sm:$0xf] %vm382, %v352
  %386 = vst.msk [vmem:[%s3 + $0xc] sm:$0xf] %vm382, %v353
  %387 = vst.msk [vmem:[%s3 + $0x10] sm:$0xf] %vm382, %v354
  %388 = vst.msk [vmem:[%s3 + $0x14] sm:$0xf] %vm382, %v355
  %389 = vst.msk [vmem:[%s3 + $0x18] sm:$0xf] %vm382, %v356
  %390 = vst.msk [vmem:[%s3 + $0x1c] sm:$0xf] %vm382, %v357
  %391 = vst.msk [vmem:[%s3 + $0x20] sm:$0xf] %vm382, %v358
  %392 = vst.msk [vmem:[%s3 + $0x24] sm:$0xf] %vm382, %v359
  %393 = vst.msk [vmem:[%s3 + $0x28] sm:$0xf] %vm382, %v360
  %394 = vst.msk [vmem:[%s3 + $0x2c] sm:$0xf] %vm382, %v361
  %395 = vst.msk [vmem:[%s3 + $0x30] sm:$0xf] %vm382, %v362
  %396 = vst.msk [vmem:[%s3 + $0x34] sm:$0xf] %vm382, %v363
  %397 = vst.msk [vmem:[%s3 + $0x38] sm:$0xf] %vm382, %v364
  %398 = vst.msk [vmem:[%s3 + $0x3c] sm:$0xf] %vm382, %v365
  // Predicated region
  $region14: #{tpu_custom_call.1} parent=0 // pred_check
    _
  $region15: #{tpu_custom_call.1} parent=0 // pred_check_branch
    %400 = sbr.rel (0) target = $region17
  $region16: #{tpu_custom_call.1} parent=0 // pred_region
    _
  $region17: #{tpu_custom_call.1} parent=0 // pred_fallthru
    _
  // Predicated region
  $region18: #{tpu_custom_call.1} parent=0 // pred_check
    _
  $region19: #{tpu_custom_call.1} parent=0 // pred_check_branch
    %402 = sbr.rel (0) target = $region21
  $region20: #{tpu_custom_call.1} parent=0 // pred_region
    _
  $region21: #{tpu_custom_call.1} parent=0 // pred_fallthru
    _

</llo_original>
